<compile_context>
chip_gen: v7x
topology: tpu7x:2x2x1
jax: 0.10.0
libtpu: 0.0.40
codegen_flags: <defaults>
</compile_context>

<pallas_src>
import math
import numpy as np

import jax
import jax.numpy as jnp
from jax.experimental import pallas as pl
from jax.experimental.pallas import tpu as pltpu


# ----------------------------------------------------------------------------
# Geometric algebra setup (plain numpy / JAX parameter glue, outside the kernel)
# ----------------------------------------------------------------------------
def build_cayley(metric):
    """Cayley tensor C[a, b, k] for a diagonal-metric GA, blades indexed by bitmask."""
    n = len(metric)
    nb = 1 << n
    C = np.zeros((nb, nb, nb), dtype=np.float32)
    for a in range(nb):
        for b in range(nb):
            swaps = 0
            t = a >> 1
            while t:
                swaps += bin(t & b).count("1")
                t >>= 1
            sign = -1.0 if (swaps & 1) else 1.0
            common = a & b
            for i in range(n):
                if (common >> i) & 1:
                    sign *= metric[i]
            C[a, b, a ^ b] += sign
    return C


def reversion_signs(nb):
    grades = np.array([bin(i).count("1") for i in range(nb)], dtype=np.int64)
    return ((-1.0) ** ((grades * (grades - 1)) // 2)).astype(np.float32)


def build_sandwich_operator(w_geom, cayley, rev):
    """S_flat[(i*NB+r),(o*NB+k)] = sum_{s,m,p} wrev[o,i,s] C[r,s,m] w[o,i,p] C[p,m,k].

    Weights-only precompute; kept in f32 (cast to the compute dtype in the wrapper).
    """
    O, I, NB = w_geom.shape
    w_rev = w_geom * rev[None, None, :]
    A = jnp.einsum("ois,rsm->oirm", w_rev, cayley)     # x-side half of the inner product
    Bm = jnp.einsum("oip,pmk->oimk", w_geom, cayley)   # w-side half of the outer product
    S = jnp.einsum("oirm,oimk->irok", A, Bm)           # (I, NB, O, NB)
    return S.reshape(I * NB, O * NB)


# ----------------------------------------------------------------------------
# Pallas kernel: tiled GEMM + bias + relu (lane-dense output, f32 accumulator)
# ----------------------------------------------------------------------------
def _sandwich_kernel(x_ref, s_ref, b_ref, o_ref, acc_ref):
    # x_ref: (TM, TK)  batch-row tile of flattened input multivectors (compute dtype)
    # s_ref: (TK, TN)  tile of the precomputed sandwich operator       (compute dtype)
    # b_ref: (1,  TN)  flattened bias multivector tile                 (f32)
    # o_ref: (TM, TN)  output tile
    # acc_ref: (TM, TN) f32 VMEM accumulator (persists across the K grid axis)
    k = pl.program_id(2)

    @pl.when(k == 0)
    def _init():
        acc_ref[...] = jnp.zeros_like(acc_ref)

    acc_ref[...] += jnp.dot(x_ref[...], s_ref[...],
                            preferred_element_type=jnp.float32)

    @pl.when(k == pl.num_programs(2) - 1)
    def _finish():
        res = acc_ref[...] + b_ref[...]
        o_ref[...] = jnp.maximum(res, 0.0).astype(o_ref.dtype)


def _round_up(a, m):
    return (a + m - 1) // m * m


def _pick_tile(dim, candidates):
    """Pick tile minimizing padded size first, then preferring the larger tile."""
    best_key, best_c = None, None
    for c in candidates:
        key = (_round_up(dim, c), -c)
        if best_key is None or key < best_key:
            best_key, best_c = key, c
    return best_c


def sandwich_dense(x_flat, s_flat, bias_flat, *,
                   compute_dtype=jnp.bfloat16, out_dtype=None,
                   tm=None, tn=None, tk=None):
    """out[b, n] = relu(x_flat[b, :] @ s_flat[:, n] + bias_flat[0, n]).

    x_flat: (B, I*NB), s_flat: (I*NB, O*NB), bias_flat: (1, O*NB) -> (B, O*NB).
    """
    B, K = x_flat.shape
    Ks, N = s_flat.shape
    assert Ks == K and bias_flat.shape == (1, N)
    if out_dtype is None:
        out_dtype = x_flat.dtype           # out_dtype=jnp.bfloat16 halves writeback bytes
    c_item = np.dtype(compute_dtype).itemsize
    o_item = np.dtype(out_dtype).itemsize
    sub = 16 if c_item < 4 else 8          # bf16 packs pairs of sublanes

    # ---- tile selection: big lane-dense tiles, minimal tail padding ----
    if tn is None:
        tn = _pick_tile(N, (128, 256, 384, 512, 768, 1024))
    if tm is None:
        cands = [128, 256, 384, 512]
        small = _round_up(B, sub)
        if small <= 512:
            cands.append(small)
        tm = _pick_tile(B, tuple(cands))
    if tk is None:
        # Keep the contraction fully resident unless the double-buffered S tile would blow
        # a v7x-sized VMEM budget; then tile K (multiple of 128, reduction axis last).
        budget = 12 << 20
        if 2 * K * tn * c_item <= budget or K <= 128:
            tk = K
        else:
            tk = max(128, ((budget // (2 * tn * c_item)) // 128) * 128)

    Bp = _round_up(B, tm)
    Np = _round_up(N, tn)
    Kp = _round_up(K, tk)

    x_p, s_p, b_p = x_flat, s_flat, bias_flat
    if (Bp, Kp) != (B, K):
        x_p = jnp.pad(x_p, ((0, Bp - B), (0, Kp - K)))
    if (Kp, Np) != (K, N):
        s_p = jnp.pad(s_p, ((0, Kp - K), (0, Np - N)))
    if Np != N:
        b_p = jnp.pad(b_p, ((0, 0), (0, Np - N)))

    x_p = x_p.astype(compute_dtype)
    s_p = s_p.astype(compute_dtype)
    b_p = b_p.astype(jnp.float32)

    grid = (Np // tn, Bp // tm, Kp // tk)   # column outer, batch inner, reduction last

    # Explicit scoped-VMEM budget (v5e default is only 16 MiB; keep below v7x physical).
    tile_bytes = (2 * (tm * tk + tk * tn) * c_item   # double-buffered x & S tiles
                  + 2 * tn * 4                       # bias tile
                  + 2 * tm * tn * o_item             # output tile
                  + tm * tn * 4)                     # f32 accumulator scratch
    vmem_limit = int(min(max(2 * tile_bytes + (4 << 20), 16 << 20), 48 << 20))

    cost = pl.CostEstimate(
        flops=2 * Bp * Kp * Np,
        transcendentals=0,
        bytes_accessed=(Bp * Kp + Kp * Np) * c_item + Np * 4 + Bp * Np * o_item)

    out = pl.pallas_call(
        _sandwich_kernel,
        out_shape=jax.ShapeDtypeStruct((Bp, Np), out_dtype),
        grid=grid,
        in_specs=[
            pl.BlockSpec((tm, tk), lambda j, i, k: (i, k)),
            pl.BlockSpec((tk, tn), lambda j, i, k: (k, j)),   # constant across batch sweep
            pl.BlockSpec((1, tn), lambda j, i, k: (0, j)),    # constant across batch sweep
        ],
        out_specs=pl.BlockSpec((tm, tn), lambda j, i, k: (i, j)),
        scratch_shapes=[pltpu.VMEM((tm, tn), jnp.float32)],
        compiler_params=pltpu.CompilerParams(
            dimension_semantics=("parallel", "parallel", "arbitrary"),
            vmem_limit_bytes=vmem_limit),
        cost_estimate=cost,
    )(x_p, s_p, b_p)
    return out[:B, :N]


# ----------------------------------------------------------------------------
# Pure-JAX reference (same math as the torch module, einsum on the Cayley tensor)
# ----------------------------------------------------------------------------
def reference(x, w_geom, w_rev, bias_geom, cayley):
    t = jnp.einsum("bir,ois,rsk->boik", x, w_rev, cayley)    # x * ~w (broadcast over O)
    r = jnp.einsum("oip,boiq,pqk->bok", w_geom, t, cayley)   # w * (.) and sum over i
    return jax.nn.relu(r + bias_geom[None])


# ----------------------------------------------------------------------------
if __name__ == "__main__":
    metric = [1.0, 1.0, 1.0]          # 3D Euclidean GA -> 8 blades
    cayley = jnp.asarray(build_cayley(metric))
    NB = cayley.shape[0]
    rev = jnp.asarray(reversion_signs(NB))

    root = jax.random.PRNGKey(0)
    case_keys = jax.random.split(root, 3)

    def make_case(key, batch, num_in, num_out, nonzero_bias):
        kx, kw, kb = jax.random.split(key, 3)
        blade_idx = np.arange(NB)                           # use all blades for the kernel
        # NOTE: the torch module sets blade_indices_bias = blade_indices_kernel regardless.
        kbl = blade_idx.shape[0]
        x = jax.random.normal(kx, (batch, num_in, NB), jnp.float32)
        fan_in, fan_out = num_in * kbl, num_out * kbl
        bound = math.sqrt(6.0 / (fan_in + fan_out))         # xavier_uniform_
        kernel = jax.random.uniform(kw, (num_out, num_in, kbl), jnp.float32,
                                    minval=-bound, maxval=bound)
        if nonzero_bias:   # module init is zeros; nonzero values exercise the bias-add path
            bias = 0.1 * jax.random.normal(kb, (num_out, kbl), jnp.float32)
        else:
            bias = jnp.zeros((num_out, kbl), jnp.float32)
        # algebra.from_tensor: scatter parameter values into the full blade dimension
        w_geom = jnp.zeros((num_out, num_in, NB), jnp.float32).at[:, :, blade_idx].set(kernel)
        bias_geom = jnp.zeros((num_out, NB), jnp.float32).at[:, blade_idx].set(bias)
        w_rev = w_geom * rev[None, None, :]
        s_flat = build_sandwich_operator(w_geom, cayley, rev)       # (I*NB, O*NB), f32
        return x, w_geom, w_rev, bias_geom, s_flat

    def run_case(key, batch, num_in, num_out, *, compute_dtype, rtol, atol,
                 nonzero_bias=False, **tile_overrides):
        x, w_geom, w_rev, bias_geom, s_flat = make_case(key, batch, num_in, num_out,
                                                        nonzero_bias)
        x_flat = x.reshape(batch, num_in * NB)
        bias_flat = bias_geom.reshape(1, num_out * NB)
        out_flat = sandwich_dense(x_flat, s_flat, bias_flat,
                                  compute_dtype=compute_dtype, **tile_overrides)
        out = jax.block_until_ready(out_flat).reshape(batch, num_out, NB)
        ref = jax.block_until_ready(reference(x, w_geom, w_rev, bias_geom, cayley))
        np.testing.assert_allclose(np.asarray(out), np.asarray(ref), rtol=rtol, atol=atol)

    # 1) Module-default small shapes, f32 operands -> tight check of the folded operator.
    run_case(case_keys[0], 2, 4, 8, compute_dtype=jnp.float32, rtol=2e-3, atol=2e-4)
    # 2) Same shapes on the fast bf16 MXU path (f32 accumulation) -> bf16-level tolerance.
    run_case(case_keys[1], 2, 4, 8, compute_dtype=jnp.bfloat16, rtol=3e-2, atol=3e-2)
    # 3) Exercise the multi-block grid + K-tiled accumulator path (grid = (2, 2, 2)).
    run_case(case_keys[2], 24, 32, 32, compute_dtype=jnp.float32, rtol=2e-3, atol=1e-3,
             nonzero_bias=True, tm=16, tn=128, tk=128)

    print("KERNEL_OK")
</pallas_src>

<mosaic_0001>
module attributes {stable_mosaic.version = 11 : i64} {
  func.func @_sandwich_kernel(%arg0: i32, %arg1: i32, %arg2: i32, %arg3: memref<8x32xf32, #tpu.memory_space<vmem>>, %arg4: memref<32x128xf32, #tpu.memory_space<vmem>>, %arg5: memref<1x128xf32, #tpu.memory_space<vmem>>, %arg6: memref<8x128xf32, #tpu.memory_space<vmem>>, %arg7: memref<8x128xf32, #tpu.memory_space<vmem>>) attributes {dimension_semantics = [#tpu.dimension_semantics<parallel>, #tpu.dimension_semantics<parallel>, #tpu.dimension_semantics<arbitrary>], iteration_bounds = array<i64: 1, 1, 1>, scalar_prefetch = 0 : i64, scratch_operands = 1 : i64, tpu.core_type = #tpu.core_type<tc>, window_params = [{transform_indices = @transform_0, window_bounds = array<i64: 8, 32>}, {transform_indices = @transform_1, window_bounds = array<i64: 32, 128>}, {transform_indices = @transform_2, window_bounds = array<i64: 1, 128>}, {transform_indices = @transform_3, window_bounds = array<i64: 8, 128>}]} {
    %c0_i32 = arith.constant 0 : i32
    %0 = arith.cmpi eq, %arg2, %c0_i32 : i32
    %1 = arith.extui %0 : i1 to i32
    %c0_i32_0 = arith.constant 0 : i32
    %2 = arith.cmpi ne, %1, %c0_i32_0 : i32
    scf.if %2 {
      %cst_10 = arith.constant 0.000000e+00 : f32
      %12 = vector.broadcast %cst_10 : f32 to vector<8x128xf32>
      %c0_11 = arith.constant 0 : index
      %c0_12 = arith.constant 0 : index
      %13 = vector.load %arg7[%c0_11, %c0_12] : memref<8x128xf32, #tpu.memory_space<vmem>>, vector<8x128xf32>
      tpu.vector_store %arg7[%c0_11, %c0_12], %12 {strides = array<i32>} : memref<8x128xf32, #tpu.memory_space<vmem>>, vector<8x128xf32>,
    } else {
    }
    %c0 = arith.constant 0 : index
    %c0_1 = arith.constant 0 : index
    %3 = vector.load %arg7[%c0, %c0_1] : memref<8x128xf32, #tpu.memory_space<vmem>>, vector<8x128xf32>
    %c0_2 = arith.constant 0 : index
    %c0_3 = arith.constant 0 : index
    %4 = vector.load %arg3[%c0_2, %c0_3] : memref<8x32xf32, #tpu.memory_space<vmem>>, vector<8x32xf32>
    %c0_4 = arith.constant 0 : index
    %c0_5 = arith.constant 0 : index
    %5 = vector.load %arg4[%c0_4, %c0_5] : memref<32x128xf32, #tpu.memory_space<vmem>>, vector<32x128xf32>
    %cst = arith.constant dense<0.000000e+00> : vector<8x128xf32>
    %6 = tpu.matmul %4, %5, %cst {dimension_numbers = #tpu.dot_dimension_numbers<[1], [0], [0], [1], [0, 0, 1, 1], [], []>} : vector<8x32xf32>, vector<32x128xf32>, vector<8x128xf32> -> vector<8x128xf32>
    %7 = arith.addf %3, %6 : vector<8x128xf32>
    %c0_6 = arith.constant 0 : index
    %c0_7 = arith.constant 0 : index
    %8 = vector.load %arg7[%c0_6, %c0_7] : memref<8x128xf32, #tpu.memory_space<vmem>>, vector<8x128xf32>
    tpu.vector_store %arg7[%c0_6, %c0_7], %7 {strides = array<i32>} : memref<8x128xf32, #tpu.memory_space<vmem>>, vector<8x128xf32>,
    %c0_i32_8 = arith.constant 0 : i32
    %9 = arith.cmpi eq, %arg2, %c0_i32_8 : i32
    %10 = arith.extui %9 : i1 to i32
    %c0_i32_9 = arith.constant 0 : i32
    %11 = arith.cmpi ne, %10, %c0_i32_9 : i32
    scf.if %11 {
      %c0_10 = arith.constant 0 : index
      %c0_11 = arith.constant 0 : index
      %12 = vector.load %arg7[%c0_10, %c0_11] : memref<8x128xf32, #tpu.memory_space<vmem>>, vector<8x128xf32>
      %c0_12 = arith.constant 0 : index
      %c0_13 = arith.constant 0 : index
      %13 = vector.load %arg5[%c0_12, %c0_13] : memref<1x128xf32, #tpu.memory_space<vmem>>, vector<1x128xf32>
      %14 = vector.broadcast %13 : vector<1x128xf32> to vector<8x128xf32>
      %15 = arith.addf %12, %14 : vector<8x128xf32>
      %cst_14 = arith.constant 0.000000e+00 : f32
      %16 = vector.broadcast %cst_14 : f32 to vector<8x128xf32>
      %17 = arith.maximumf %15, %16 : vector<8x128xf32>
      %c0_15 = arith.constant 0 : index
      %c0_16 = arith.constant 0 : index
      %18 = vector.load %arg6[%c0_15, %c0_16] : memref<8x128xf32, #tpu.memory_space<vmem>>, vector<8x128xf32>
      tpu.vector_store %arg6[%c0_15, %c0_16], %17 {strides = array<i32>} : memref<8x128xf32, #tpu.memory_space<vmem>>, vector<8x128xf32>,
    } else {
    }
    return
  }
  func.func @transform_0(%arg0: i32, %arg1: i32, %arg2: i32) -> (i32, i32) {
    %c0_i32 = arith.constant 0 : i32
    return %arg1, %arg2 : i32, i32
  }
  func.func @transform_1(%arg0: i32, %arg1: i32, %arg2: i32) -> (i32, i32) {
    %c0_i32 = arith.constant 0 : i32
    return %arg2, %arg0 : i32, i32
  }
  func.func @transform_2(%arg0: i32, %arg1: i32, %arg2: i32) -> (i32, i32) {
    %c0_i32 = arith.constant 0 : i32
    %c0_i32_0 = arith.constant 0 : i32
    return %c0_i32, %arg0 : i32, i32
  }
  func.func @transform_3(%arg0: i32, %arg1: i32, %arg2: i32) -> (i32, i32) {
    %c0_i32 = arith.constant 0 : i32
    return %arg1, %arg0 : i32, i32
  }
}

</mosaic_0001>

<llo_original>
// kernel: tpu_custom_call.1
$region0: #{tpu_custom_call.1}
  #allocation0 [shape = 'u32[]', space=smem, size = 0x4, offset = 0x4, fixed_abs, tag = 'smem constant byte address 0x4 - core index']
  #allocation1 [shape = 'u32[144,128]{1,0:T(1,128)}', space=vmem, size = 0x12000, scoped, tag = 'internal scratch']
  #allocation2 [shape = 'f32[8,128]{1,0:T(8,128)}', space=vmem, size = 0x1000, scoped, tag = 'scratch operand']
  %s0 = inlined_call_operand.hbm [shape: f32[8,32], index: 0, kind: input, shape index: {}]
  %s1 = inlined_call_operand.hbm [shape: f32[32,128], index: 1, kind: input, shape index: {}]
  %s2 = inlined_call_operand.vmem [shape: f32[1,128], index: 2, kind: input, shape index: {}]
  %s3 = inlined_call_operand.hbm [shape: f32[8,128], index: 3, kind: output, shape index: {}]
  %s4 = sld [smem:[#allocation0]]
  $region38: #{tpu_custom_call.1} parent=0
    _
  %s6 = ssub.s32 1, %s4
  %s7 = scalar_select 0, %s6, %s4
  $region1: #{tpu_custom_call.1} parent=0
    #allocation3 [shape = 'u8[4096]{0}', space=vmem, size = 0x1000, scoped, tag = 'input window, operand 0, single buffered']
    #allocation4 [shape = 's32[1]{0}', space=sflag, size = 0x4, scoped, tag = 'scoped memory for tpu_custom_call.1']
    #allocation5 [shape = 's32[1]{0}', space=sflag, size = 0x4, scoped, tag = 'scoped memory for tpu_custom_call.1']
    #allocation6 [shape = 'u8[16384]{0}', space=vmem, size = 0x4000, scoped, tag = 'input window, operand 1, single buffered']
    #allocation7 [shape = 's32[1]{0}', space=sflag, size = 0x4, scoped, tag = 'scoped memory for tpu_custom_call.1']
    #allocation8 [shape = 'u8[4096]{0}', space=vmem, size = 0x1000, scoped, tag = 'output window, operand 0, single buffered']
    %8 = vsyncpa [#allocation4], 0
    %9 = vsyncpa [#allocation7], 0
    %10 = vsyncpa [#allocation5], 0
    // Predicated region
    $region2: #{tpu_custom_call.1} parent=1 // pred_check
      _
    $region3: #{tpu_custom_call.1} parent=1 // pred_check_branch
      %12 = sbr.rel (0) target = $region5
    $region4: #{tpu_custom_call.1} parent=1 // pred_region
      %s14 = ssub.s32 128, 128
      %15 = vsyncadd [#allocation4], %s14
      %s17 = sshll.u32 [#allocation3], 4
      %s18 = int_to_ptr.vmem [resolvable:$true] %s17
      %20 = dma.hbm_to_vmem [thread:$0]  %s0, 128, %s18, [#allocation4]
    $region5: #{tpu_custom_call.1} parent=1 // pred_fallthru
      _
    // Predicated region
    $region6: #{tpu_custom_call.1} parent=1 // pred_check
      _
    $region7: #{tpu_custom_call.1} parent=1 // pred_check_branch
      %22 = sbr.rel (0) target = $region9
    $region8: #{tpu_custom_call.1} parent=1 // pred_region
      %s24 = ssub.s32 512, 512
      %25 = vsyncadd [#allocation7], %s24
      %s26 = sshll.u32 [#allocation6], 4
      %s27 = int_to_ptr.vmem [resolvable:$true] %s26
      %32 = dma.hbm_to_vmem [thread:$0]  %s1, 512, %s27, [#allocation7], 128, 128, 8
    $region9: #{tpu_custom_call.1} parent=1 // pred_fallthru
      _
    // Predicated region
    $region10: #{tpu_custom_call.1} parent=1 // pred_check
      _
    $region11: #{tpu_custom_call.1} parent=1 // pred_check_branch
      %34 = sbr.rel (0) target = $region13
    $region12: #{tpu_custom_call.1} parent=1 // pred_region
      _
    $region13: #{tpu_custom_call.1} parent=1 // pred_fallthru
      _
    // Predicated region
    $region14: #{tpu_custom_call.1} parent=1 // pred_check
      _
    $region15: #{tpu_custom_call.1} parent=1 // pred_check_branch
      %36 = sbr.rel (0) target = $region17
    $region16: #{tpu_custom_call.1} parent=1 // pred_region
      %37 = dma.done [#allocation4], 128
    $region17: #{tpu_custom_call.1} parent=1 // pred_fallthru
      _
    // Predicated region
    $region18: #{tpu_custom_call.1} parent=1 // pred_check
      _
    $region19: #{tpu_custom_call.1} parent=1 // pred_check_branch
      %39 = sbr.rel (0) target = $region21
    $region20: #{tpu_custom_call.1} parent=1 // pred_region
      %40 = dma.done [#allocation7], 512
    $region21: #{tpu_custom_call.1} parent=1 // pred_fallthru
      _
    %p41 = scmp.eq.s32.totalorder 0, 0
    // Predicated region
    $region22: #{tpu_custom_call.1} parent=1 // pred_check
      %p42 = pneg %p41
    $region23: #{tpu_custom_call.1} parent=1 // pred_check_branch
      %44 = sbr.rel (%p42) target = $region25
    $region24: #{tpu_custom_call.1} parent=1 // pred_region
      %45 = vst [vmem:[#allocation2] sm:$0xff] 0.0
    $region25: #{tpu_custom_call.1} parent=1 // pred_fallthru
      _
    %v46 = vld [vmem:[#allocation2] sm:$0xff]
    %v47 = vld [vmem:[#allocation3] sm:$0xff]
    %v48 = vld [vmem:[#allocation6] sm:$0xff]
    %v49 = vld [vmem:[#allocation6 + $0x8] sm:$0xff]
    %v50 = vld [vmem:[#allocation6 + $0x10] sm:$0xff]
    %v51 = vld [vmem:[#allocation6 + $0x18] sm:$0xff]
    %vm52 = vcmask 261120
    %v54 = vsel %vm52, %v47, 0
    %56 = vmatprep.subr.mxu0 0.0
    %57 = vmatpush1.msra.mxu0 %v48
    %58 = vmatprep.subr.mxu0 0.0
    %59 = vmatpush1.msra.mxu0 %v49
    %60 = vmatprep.subr.mxu0 0.0
    %61 = vmatpush1.msra.mxu0 %v50
    %62 = vmatprep.subr.mxu0 0.0
    %63 = vmatpush1.msra.mxu0 %v51
    %64 = vmatprep.subr.mxu0 0.0
    %65 = vmatpush1.msra.mxu0 0.0
    %66 = vmatprep.subr.mxu0 0.0
    %67 = vmatpush1.msra.mxu0 0.0
    %68 = vmatprep.subr.mxu0 0.0
    %69 = vmatpush1.msra.mxu0 0.0
    %70 = vmatprep.subr.mxu0 0.0
    %71 = vmatpush1.msra.mxu0 0.0
    %72 = vmatprep.subr.mxu0 0.0
    %73 = vmatpush1.msra.mxu0 0.0
    %74 = vmatprep.subr.mxu0 0.0
    %75 = vmatpush1.msra.mxu0 0.0
    %76 = vmatprep.subr.mxu0 0.0
    %77 = vmatpush1.msra.mxu0 0.0
    %78 = vmatprep.subr.mxu0 0.0
    %79 = vmatpush1.msra.mxu0 0.0
    %80 = vmatprep.subr.mxu0 0.0
    %81 = vmatpush1.msra.mxu0 0.0
    %82 = vmatprep.subr.mxu0 0.0
    %83 = vmatpush1.msra.mxu0 0.0
    %84 = vmatprep.subr.mxu0 0.0
    %85 = vmatpush1.msra.mxu0 0.0
    %86 = vmatprep.subr.mxu0 0.0
    %87 = vmatpush1.msra.mxu0 0.0
    %88 = vmatprep.subr.mxu0 0.0
    %89 = vmatpush1.msra.mxu0 0.0
    %90 = vmatprep.subr.mxu0 0.0
    %91 = vmatpush1.msra.mxu0 0.0
    %92 = vmatprep.subr.mxu0 0.0
    %93 = vmatpush1.msra.mxu0 0.0
    %94 = vmatprep.subr.mxu0 0.0
    %95 = vmatpush1.msra.mxu0 0.0
    %96 = vmatprep.subr.mxu0 0.0
    %97 = vmatpush1.msra.mxu0 0.0
    %98 = vmatprep.subr.mxu0 0.0
    %99 = vmatpush1.msra.mxu0 0.0
    %100 = vmatprep.subr.mxu0 0.0
    %101 = vmatpush1.msra.mxu0 0.0
    %102 = vmatprep.subr.mxu0 0.0
    %103 = vmatpush1.msra.mxu0 0.0
    %104 = vmatprep.subr.mxu0 0.0
    %105 = vmatpush1.msra.mxu0 0.0
    %106 = vmatprep.subr.mxu0 0.0
    %107 = vmatpush1.msra.mxu0 0.0
    %108 = vmatprep.subr.mxu0 0.0
    %109 = vmatpush1.msra.mxu0 0.0
    %110 = vmatprep.subr.mxu0 0.0
    %111 = vmatpush1.msra.mxu0 0.0
    %112 = vmatprep.subr.mxu0 0.0
    %113 = vmatpush1.msra.mxu0 0.0
    %114 = vmatprep.subr.mxu0 0.0
    %115 = vmatpush1.msra.mxu0 0.0
    %116 = vmatprep.subr.mxu0 0.0
    %117 = vmatpush1.msra.mxu0 0.0
    %118 = vmatprep.subr.mxu0 0.0
    %119 = vmatpush1.msra.mxu0 0.0
    %120 = vmatprep.mubr.f32.mxu0 0.0
    %121 = vmatmul.mubr.f32.gmra.mrb[0].mxu0 %v54
    %v122 = vpop.f32.mrb[0].mxu0
    %v123 = vadd.f32 0.0, %v122
    %v124 = vpop.f32.mrb[0].mxu0
    %125 = vdwg.mxu0
    %v126 = vadd.f32 %v46, %v123
    %127 = vst [vmem:[#allocation2] sm:$0xff] %v126
    // Predicated region
    $region26: #{tpu_custom_call.1} parent=1 // pred_check
      %p128 = pneg %p41
    $region27: #{tpu_custom_call.1} parent=1 // pred_check_branch
      %130 = sbr.rel (%p128) target = $region29
    $region28: #{tpu_custom_call.1} parent=1 // pred_region
      %v131 = vld [vmem:[#allocation2] sm:$0xff]
      %v132 = vld [vmem:[%s2] sm:$0x1]
      %v134 = vlaneseq
      %v135 = vshrl.u32 %v134, 7
      %v136 = vsub.s32 0, %v135
      %v137 = vrot.slane %v132, %v136
      %v139 = vadd.f32 %v131, %v137
      %v140 = vmax.f32 %v139, 0.0
      %141 = vst [vmem:[#allocation8] sm:$0xff] %v140
    $region29: #{tpu_custom_call.1} parent=1 // pred_fallthru
      _
    // Predicated region
    $region30: #{tpu_custom_call.1} parent=1 // pred_check
      _
    $region31: #{tpu_custom_call.1} parent=1 // pred_check_branch
      %143 = sbr.rel (0) target = $region33
    $region32: #{tpu_custom_call.1} parent=1 // pred_region
      %s145 = ssub.s32 128, 128
      %146 = vsyncadd [#allocation5], %s145
      %s148 = sshll.u32 [#allocation8], 4
      %s149 = int_to_ptr.vmem [resolvable:$true] %s148
      %151 = dma.vmem_to_hbm [thread:$0]  %s149, 128, %s3, [#allocation5]
    $region33: #{tpu_custom_call.1} parent=1 // pred_fallthru
      _
    // Predicated region
    $region34: #{tpu_custom_call.1} parent=1 // pred_check
      _
    $region35: #{tpu_custom_call.1} parent=1 // pred_check_branch
      %153 = sbr.rel (0) target = $region37
    $region36: #{tpu_custom_call.1} parent=1 // pred_region
      %154 = dma.done [#allocation5], 128
    $region37: #{tpu_custom_call.1} parent=1 // pred_fallthru
      _
    %155 = vsyncpa [#allocation4], 1
    %156 = vsyncpa [#allocation7], 1
    %157 = vsyncpa [#allocation5], 1

</llo_original>
